<compile_context>
chip_gen: v7x
topology: tpu7x:2x2x1
jax: 0.10.0
libtpu: 0.0.40
codegen_flags: <defaults>
</compile_context>

<pallas_src>
import jax
import jax.numpy as jnp
from jax import lax
from jax.experimental import pallas as pl
from jax.experimental.pallas import tpu as pltpu

EMB_DIM = 32
GENRE_DIM = 24
SIDE_DIM = GENRE_DIM + 3            # genres(24) + lang(1) + vote_count(1) + vote_avg(1)
FEAT_DIM = 2 * EMB_DIM + SIDE_DIM   # 91
H1, H2, OUT = 64, 32, 1

VOTE_COUNT_COL = 2 * EMB_DIM + GENRE_DIM + 1   # column 89 of the feature vector
VOTE_COUNT_SCALE = 1000.0                      # folded into W1 row 89 (exact no-op)

SUBLANE = 16                        # bf16 sublane packing (also valid for f32)
DEFAULT_TILE_B = 8192               # ~1.5 MiB/step of bf16 features; fits all gens


def _round_up(x, m):
    return ((x + m - 1) // m) * m


# ----------------------------------------------------------------------------
# Kernel: 3-layer MLP on one batch tile.  Weights are VMEM-resident.
# ----------------------------------------------------------------------------
def _mlp_kernel(x_ref, w1_ref, b1_ref, w2_ref, b2_ref, w3t_ref, b3_ref, out_ref):
    # Linear(91 -> 64) + ReLU.  bf16 x bf16 -> f32 accumulate (single MXU pass).
    h1 = jnp.dot(x_ref[...], w1_ref[...],
                 preferred_element_type=jnp.float32) + b1_ref[...]
    h1 = jnp.maximum(h1, 0.0)                                  # f32 elementwise

    # Linear(64 -> 32) + ReLU.
    h2 = jnp.dot(h1.astype(w2_ref.dtype), w2_ref[...],
                 preferred_element_type=jnp.float32) + b2_ref[...]
    h2 = jnp.maximum(h2, 0.0)

    # Linear(32 -> 1), emitted lane-dense: (1, 32) contracted with (TILE_B, 32)
    # on dim 1 -> (1, TILE_B), stored unmasked (no 1-wide vst.msk writeback).
    out_row = lax.dot_general(
        w3t_ref[...], h2.astype(w3t_ref.dtype),
        dimension_numbers=(((1,), (1,)), ((), ())),
        preferred_element_type=jnp.float32,
    ) + b3_ref[...]                                            # (1, TILE_B)

    out_ref[...] = out_row.reshape(out_ref.shape).astype(out_ref.dtype)


# ----------------------------------------------------------------------------
# Wrapper-side preparation (shared with the precision-matched reference so the
# test compares identical casts).
# ----------------------------------------------------------------------------
def _prepare_features(params, user, movie, genres, lang, vote_count, vote_avg,
                      stream_dtype):
    u = params["user_emb"][user].astype(jnp.float32)           # (B, 32)
    m = params["movie_emb"][movie].astype(jnp.float32)         # (B, 32)
    vc = vote_count.astype(jnp.float32) * (1.0 / VOTE_COUNT_SCALE)
    feat = jnp.concatenate(
        [u, m, genres.astype(jnp.float32), lang.astype(jnp.float32),
         vc, vote_avg.astype(jnp.float32)], axis=1)            # (B, 91) f32
    return feat.astype(stream_dtype)


def _prepare_weights(params, stream_dtype):
    w1 = params["w1"].astype(jnp.float32)
    w1 = w1.at[VOTE_COUNT_COL].multiply(VOTE_COUNT_SCALE)      # undo the 1/1000 scale
    w1 = w1.astype(stream_dtype)                               # (91, 64)
    w2 = params["w2"].astype(stream_dtype)                     # (64, 32)
    w3t = params["w3"].T.astype(stream_dtype)                  # (1, 32)
    b1 = params["b1"].astype(jnp.float32)                      # (1, 64)
    b2 = params["b2"].astype(jnp.float32)                      # (1, 32)
    b3 = params["b3"].astype(jnp.float32)                      # (1, 1)
    return w1, b1, w2, b2, w3t, b3


def recsys_forward(params, user, movie, genres, lang, vote_count, vote_avg,
                   *, tile_b=DEFAULT_TILE_B, stream_dtype=jnp.bfloat16):
    """Embedding gathers in JAX glue + batch-tiled Pallas MLP kernel."""
    feat = _prepare_features(params, user, movie, genres, lang, vote_count,
                             vote_avg, stream_dtype)
    w1, b1, w2, b2, w3t, b3 = _prepare_weights(params, stream_dtype)

    B = feat.shape[0]
    # v7x megacore: cap the tile so there are >= 2 balanced grid steps when the
    # batch allows it (no effect on v5e/v6e which have a single TensorCore).
    half = _round_up(pl.cdiv(B, 2), SUBLANE)
    tile_b = max(SUBLANE, min(_round_up(int(tile_b), SUBLANE), half))
    num_tiles = pl.cdiv(B, tile_b)
    b_pad = num_tiles * tile_b
    if b_pad != B:
        feat = jnp.pad(feat, ((0, b_pad - B), (0, 0)))

    itemsize = jnp.dtype(stream_dtype).itemsize
    flops = 2 * b_pad * (FEAT_DIM * H1 + H1 * H2 + H2 * OUT)
    bytes_accessed = int(
        b_pad * FEAT_DIM * itemsize                    # streamed features in
        + b_pad * OUT * 4                              # f32 output
        + (FEAT_DIM * H1 + H1 * H2 + H2 * OUT) * itemsize   # resident weights
        + (H1 + H2 + OUT) * 4)                         # f32 biases

    out = pl.pallas_call(
        _mlp_kernel,
        out_shape=jax.ShapeDtypeStruct((num_tiles, 1, tile_b), jnp.float32),
        grid=(num_tiles,),
        in_specs=[
            # Single batch-tiled feature stream.
            pl.BlockSpec((tile_b, FEAT_DIM), lambda i: (i, 0)),
            # Weights / biases: constant block index -> fetched once, VMEM-resident.
            pl.BlockSpec((FEAT_DIM, H1), lambda i: (0, 0)),     # w1
            pl.BlockSpec((1, H1), lambda i: (0, 0)),            # b1
            pl.BlockSpec((H1, H2), lambda i: (0, 0)),           # w2
            pl.BlockSpec((1, H2), lambda i: (0, 0)),            # b2
            pl.BlockSpec((1, H2), lambda i: (0, 0)),            # w3^T
            pl.BlockSpec((1, 1), lambda i: (0, 0)),             # b3
        ],
        out_specs=pl.BlockSpec((1, 1, tile_b), lambda i: (i, 0, 0)),
        compiler_params=pltpu.CompilerParams(
            dimension_semantics=("parallel",),
            vmem_limit_bytes=40 * 1024 * 1024),
        cost_estimate=pl.CostEstimate(
            flops=flops, transcendentals=0, bytes_accessed=bytes_accessed),
    )(feat, w1, b1, w2, b2, w3t, b3)

    # (num_tiles, 1, tile_b) -> (B, 1): row-major flatten preserves batch order.
    return out.reshape(b_pad, 1)[:B]


# ----------------------------------------------------------------------------
# Parameter init (matches PyTorch defaults: Embedding ~ N(0,1), Linear ~ U).
# ----------------------------------------------------------------------------
def init_params(key, num_users, num_movies):
    ks = jax.random.split(key, 8)

    def linear(kw, kb, fan_in, fan_out):
        bound = 1.0 / jnp.sqrt(fan_in)
        w = jax.random.uniform(kw, (fan_in, fan_out), jnp.float32, -bound, bound)
        b = jax.random.uniform(kb, (1, fan_out), jnp.float32, -bound, bound)
        return w, b

    w1, b1 = linear(ks[2], ks[3], FEAT_DIM, H1)
    w2, b2 = linear(ks[4], ks[5], H1, H2)
    w3, b3 = linear(ks[6], ks[7], H2, OUT)
    return {
        "user_emb": jax.random.normal(ks[0], (num_users, EMB_DIM), jnp.float32),
        "movie_emb": jax.random.normal(ks[1], (num_movies, EMB_DIM), jnp.float32),
        "w1": w1, "b1": b1, "w2": w2, "b2": b2, "w3": w3, "b3": b3,
    }


# ----------------------------------------------------------------------------
# References.
# ----------------------------------------------------------------------------
def _reference_f32(params, user, movie, genres, lang, vote_count, vote_avg):
    """Full-f32 reference (exact semantics of the PyTorch module)."""
    u = params["user_emb"][user]
    m = params["movie_emb"][movie]
    feat = jnp.concatenate([u, m, genres, lang, vote_count, vote_avg], axis=1)
    hp = lax.Precision.HIGHEST
    h1 = jnp.maximum(jnp.dot(feat, params["w1"], precision=hp) + params["b1"], 0.0)
    h2 = jnp.maximum(jnp.dot(h1, params["w2"], precision=hp) + params["b2"], 0.0)
    return jnp.dot(h2, params["w3"], precision=hp) + params["b3"]


def _reference_matched(params, user, movie, genres, lang, vote_count, vote_avg,
                       stream_dtype=jnp.bfloat16):
    """Same bf16-stream / f32-accumulate precision choices as the kernel."""
    feat = _prepare_features(params, user, movie, genres, lang, vote_count,
                             vote_avg, stream_dtype)
    w1, b1, w2, b2, w3t, b3 = _prepare_weights(params, stream_dtype)
    h1 = jnp.maximum(jnp.dot(feat, w1, preferred_element_type=jnp.float32) + b1, 0.0)
    h2 = jnp.maximum(jnp.dot(h1.astype(w2.dtype), w2,
                             preferred_element_type=jnp.float32) + b2, 0.0)
    return jnp.dot(h2.astype(w3t.dtype), w3t.T,
                   preferred_element_type=jnp.float32) + b3


def _make_inputs(key, B, num_users, num_movies):
    dks = jax.random.split(key, 6)
    user = jax.random.randint(dks[0], (B,), 0, num_users)
    movie = jax.random.randint(dks[1], (B,), 0, num_movies)
    genres = jax.random.bernoulli(dks[2], 0.3, (B, GENRE_DIM)).astype(jnp.float32)
    lang = jax.random.randint(dks[3], (B, 1), 0, 5).astype(jnp.float32)
    vote_count = jax.random.uniform(dks[4], (B, 1), jnp.float32, 0.0, 1000.0)
    vote_avg = jax.random.uniform(dks[5], (B, 1), jnp.float32, 0.0, 10.0)
    return user, movie, genres, lang, vote_count, vote_avg


if __name__ == "__main__":
    key = jax.random.PRNGKey(0)
    num_users, num_movies, B = 16, 16, 8

    pkey, dkey, dkey2 = jax.random.split(key, 3)
    params = init_params(pkey, num_users, num_movies)

    # Small single-tile test.
    inputs = _make_inputs(dkey, B, num_users, num_movies)
    out = jax.block_until_ready(recsys_forward(params, *inputs))
    assert out.shape == (B, 1), out.shape
    # Tight check against a reference using identical bf16/f32 precision choices.
    ref_m = _reference_matched(params, *inputs)
    assert jnp.allclose(out, ref_m, atol=2e-2, rtol=2e-2), (out, ref_m)
    # Loose sanity check against the full-f32 semantics (bf16 stream rounding only).
    ref32 = _reference_f32(params, *inputs)
    assert jnp.allclose(out, ref32, atol=5.0, rtol=0.1), (out, ref32)

    # Multi-tile test: exercises the batch grid + partial-tile padding path.
    B2 = 200
    inputs2 = _make_inputs(dkey2, B2, num_users, num_movies)
    out2 = jax.block_until_ready(recsys_forward(params, *inputs2, tile_b=64))
    assert out2.shape == (B2, 1), out2.shape
    ref2 = _reference_matched(params, *inputs2)
    assert jnp.allclose(out2, ref2, atol=2e-2, rtol=2e-2), (out2, ref2)

    print("KERNEL_OK")
</pallas_src>

<mosaic_0001>
module attributes {stable_mosaic.version = 11 : i64} {
  func.func @_mlp_kernel(%arg0: i32, %arg1: memref<16x91xbf16, #tpu.memory_space<vmem>>, %arg2: memref<91x64xbf16, #tpu.memory_space<vmem>>, %arg3: memref<1x64xf32, #tpu.memory_space<vmem>>, %arg4: memref<64x32xbf16, #tpu.memory_space<vmem>>, %arg5: memref<1x32xf32, #tpu.memory_space<vmem>>, %arg6: memref<1x32xbf16, #tpu.memory_space<vmem>>, %arg7: memref<1x1xf32, #tpu.memory_space<vmem>>, %arg8: memref<1x1x16xf32, #tpu.memory_space<vmem>>) attributes {dimension_semantics = [#tpu.dimension_semantics<parallel>], iteration_bounds = array<i64: 1>, scalar_prefetch = 0 : i64, scratch_operands = 0 : i64, tpu.core_type = #tpu.core_type<tc>, window_params = [{transform_indices = @transform_0, window_bounds = array<i64: 16, 91>}, {pipeline_mode = #tpu.pipeline_mode<synchronous>, transform_indices = @transform_1, window_bounds = array<i64: 91, 64>}, {pipeline_mode = #tpu.pipeline_mode<synchronous>, transform_indices = @transform_2, window_bounds = array<i64: 1, 64>}, {pipeline_mode = #tpu.pipeline_mode<synchronous>, transform_indices = @transform_3, window_bounds = array<i64: 64, 32>}, {pipeline_mode = #tpu.pipeline_mode<synchronous>, transform_indices = @transform_4, window_bounds = array<i64: 1, 32>}, {pipeline_mode = #tpu.pipeline_mode<synchronous>, transform_indices = @transform_5, window_bounds = array<i64: 1, 32>}, {pipeline_mode = #tpu.pipeline_mode<synchronous>, transform_indices = @transform_6, window_bounds = array<i64: 1, 1>}, {transform_indices = @transform_7, window_bounds = array<i64: 1, 1, 16>}]} {
    %c0 = arith.constant 0 : index
    %c0_0 = arith.constant 0 : index
    %0 = vector.load %arg1[%c0, %c0_0] : memref<16x91xbf16, #tpu.memory_space<vmem>>, vector<16x91xbf16>
    %c0_1 = arith.constant 0 : index
    %c0_2 = arith.constant 0 : index
    %1 = vector.load %arg2[%c0_1, %c0_2] : memref<91x64xbf16, #tpu.memory_space<vmem>>, vector<91x64xbf16>
    %cst = arith.constant dense<0.000000e+00> : vector<16x64xf32>
    %2 = tpu.matmul %0, %1, %cst {dimension_numbers = #tpu.dot_dimension_numbers<[1], [0], [0], [1], [0, 0, 1, 1], [], []>} : vector<16x91xbf16>, vector<91x64xbf16>, vector<16x64xf32> -> vector<16x64xf32>
    %c0_3 = arith.constant 0 : index
    %c0_4 = arith.constant 0 : index
    %3 = vector.load %arg3[%c0_3, %c0_4] : memref<1x64xf32, #tpu.memory_space<vmem>>, vector<1x64xf32>
    %4 = vector.broadcast %3 : vector<1x64xf32> to vector<16x64xf32>
    %5 = arith.addf %2, %4 : vector<16x64xf32>
    %cst_5 = arith.constant 0.000000e+00 : f32
    %6 = vector.broadcast %cst_5 : f32 to vector<16x64xf32>
    %7 = arith.maximumf %5, %6 : vector<16x64xf32>
    %8 = arith.truncf %7 : vector<16x64xf32> to vector<16x64xbf16>
    %c0_6 = arith.constant 0 : index
    %c0_7 = arith.constant 0 : index
    %9 = vector.load %arg4[%c0_6, %c0_7] : memref<64x32xbf16, #tpu.memory_space<vmem>>, vector<64x32xbf16>
    %cst_8 = arith.constant dense<0.000000e+00> : vector<16x32xf32>
    %10 = tpu.matmul %8, %9, %cst_8 {dimension_numbers = #tpu.dot_dimension_numbers<[1], [0], [0], [1], [0, 0, 1, 1], [], []>} : vector<16x64xbf16>, vector<64x32xbf16>, vector<16x32xf32> -> vector<16x32xf32>
    %c0_9 = arith.constant 0 : index
    %c0_10 = arith.constant 0 : index
    %11 = vector.load %arg5[%c0_9, %c0_10] : memref<1x32xf32, #tpu.memory_space<vmem>>, vector<1x32xf32>
    %12 = vector.broadcast %11 : vector<1x32xf32> to vector<16x32xf32>
    %13 = arith.addf %10, %12 : vector<16x32xf32>
    %cst_11 = arith.constant 0.000000e+00 : f32
    %14 = vector.broadcast %cst_11 : f32 to vector<16x32xf32>
    %15 = arith.maximumf %13, %14 : vector<16x32xf32>
    %c0_12 = arith.constant 0 : index
    %c0_13 = arith.constant 0 : index
    %16 = vector.load %arg6[%c0_12, %c0_13] : memref<1x32xbf16, #tpu.memory_space<vmem>>, vector<1x32xbf16>
    %17 = arith.truncf %15 : vector<16x32xf32> to vector<16x32xbf16>
    %cst_14 = arith.constant dense<0.000000e+00> : vector<1x16xf32>
    %18 = tpu.matmul %16, %17, %cst_14 {dimension_numbers = #tpu.dot_dimension_numbers<[1], [1], [0], [0], [0, 0, 1, 0], [], []>} : vector<1x32xbf16>, vector<16x32xbf16>, vector<1x16xf32> -> vector<1x16xf32>
    %c0_15 = arith.constant 0 : index
    %c0_16 = arith.constant 0 : index
    %19 = vector.load %arg7[%c0_15, %c0_16] : memref<1x1xf32, #tpu.memory_space<vmem>>, vector<1x1xf32>
    %20 = vector.broadcast %19 : vector<1x1xf32> to vector<1x16xf32>
    %21 = arith.addf %18, %20 : vector<1x16xf32>
    %22 = vector.shape_cast %21 : vector<1x16xf32> to vector<1x1x16xf32>
    %c0_17 = arith.constant 0 : index
    %c0_18 = arith.constant 0 : index
    %c0_19 = arith.constant 0 : index
    %23 = vector.load %arg8[%c0_17, %c0_18, %c0_19] : memref<1x1x16xf32, #tpu.memory_space<vmem>>, vector<1x1x16xf32>
    tpu.vector_store %arg8[%c0_17, %c0_18, %c0_19], %22 {strides = array<i32>} : memref<1x1x16xf32, #tpu.memory_space<vmem>>, vector<1x1x16xf32>,
    return
  }
  func.func @transform_0(%arg0: i32) -> (i32, i32) {
    %c0_i32 = arith.constant 0 : i32
    %c0_i32_0 = arith.constant 0 : i32
    return %arg0, %c0_i32 : i32, i32
  }
  func.func @transform_1(%arg0: i32) -> (i32, i32) {
    %c0_i32 = arith.constant 0 : i32
    %c0_i32_0 = arith.constant 0 : i32
    %c0_i32_1 = arith.constant 0 : i32
    return %c0_i32, %c0_i32_0 : i32, i32
  }
  func.func @transform_2(%arg0: i32) -> (i32, i32) {
    %c0_i32 = arith.constant 0 : i32
    %c0_i32_0 = arith.constant 0 : i32
    %c0_i32_1 = arith.constant 0 : i32
    return %c0_i32, %c0_i32_0 : i32, i32
  }
  func.func @transform_3(%arg0: i32) -> (i32, i32) {
    %c0_i32 = arith.constant 0 : i32
    %c0_i32_0 = arith.constant 0 : i32
    %c0_i32_1 = arith.constant 0 : i32
    return %c0_i32, %c0_i32_0 : i32, i32
  }
  func.func @transform_4(%arg0: i32) -> (i32, i32) {
    %c0_i32 = arith.constant 0 : i32
    %c0_i32_0 = arith.constant 0 : i32
    %c0_i32_1 = arith.constant 0 : i32
    return %c0_i32, %c0_i32_0 : i32, i32
  }
  func.func @transform_5(%arg0: i32) -> (i32, i32) {
    %c0_i32 = arith.constant 0 : i32
    %c0_i32_0 = arith.constant 0 : i32
    %c0_i32_1 = arith.constant 0 : i32
    return %c0_i32, %c0_i32_0 : i32, i32
  }
  func.func @transform_6(%arg0: i32) -> (i32, i32) {
    %c0_i32 = arith.constant 0 : i32
    %c0_i32_0 = arith.constant 0 : i32
    %c0_i32_1 = arith.constant 0 : i32
    return %c0_i32, %c0_i32_0 : i32, i32
  }
  func.func @transform_7(%arg0: i32) -> (i32, i32, i32) {
    %c0_i32 = arith.constant 0 : i32
    %c0_i32_0 = arith.constant 0 : i32
    %c0_i32_1 = arith.constant 0 : i32
    return %arg0, %c0_i32, %c0_i32_0 : i32, i32, i32
  }
}

</mosaic_0001>

<llo_original>
// kernel: tpu_custom_call.1
$region0: #{tpu_custom_call.1}
  #allocation0 [shape = 'u32[]', space=smem, size = 0x4, offset = 0x4, fixed_abs, tag = 'smem constant byte address 0x4 - core index']
  #allocation1 [shape = 'u32[144,128]{1,0:T(1,128)}', space=vmem, size = 0x12000, scoped, tag = 'internal scratch']
  #allocation2 [shape = 'f32[1,1]{1,0:T(1,128)S(1)}', space=vmem, size = 0x200, scoped, tag = 'scoped memory for tpu_custom_call.1']
  %s0 = inlined_call_operand.vmem [shape: bf16[16,91], index: 0, kind: input, shape index: {}]
  %s1 = inlined_call_operand.vmem [shape: bf16[91,64], index: 1, kind: input, shape index: {}]
  %s2 = inlined_call_operand.vmem [shape: f32[1,64], index: 2, kind: input, shape index: {}]
  %s3 = inlined_call_operand.vmem [shape: bf16[64,32], index: 3, kind: input, shape index: {}]
  %s4 = inlined_call_operand.vmem [shape: f32[1,32], index: 4, kind: input, shape index: {}]
  %s5 = inlined_call_operand.vmem [shape: bf16[1,32], index: 5, kind: input, shape index: {}]
  %s6 = inlined_call_operand.<no memory space> [shape: f32[1,1], index: 6, kind: input, shape index: {}]
  %s7 = inlined_call_operand.hbm [shape: f32[1,1,16], index: 7, kind: output, shape index: {}]
  %s8 = sld [smem:[#allocation0]]
  $region38: #{tpu_custom_call.1} parent=0
    _
  %s10 = ssub.s32 1, %s8
  %s11 = scalar_select 0, %s10, %s8
  %v12 = vstv %s6
  %13 = vst [vmem:[#allocation2] sm:$0x1] %v12
  $region1: #{tpu_custom_call.1} parent=0
    #allocation3 [shape = 'u8[512]{0}', space=vmem, size = 0x400, scoped, tag = 'output window, operand 0, single buffered']
    #allocation4 [shape = 's32[1]{0}', space=sflag, size = 0x4, scoped, tag = 'scoped memory for tpu_custom_call.1']
    %14 = vsyncpa [#allocation4], 0
    // Predicated region
    $region2: #{tpu_custom_call.1} parent=1 // pred_check
      _
    $region3: #{tpu_custom_call.1} parent=1 // pred_check_branch
      %16 = sbr.rel (0) target = $region5
    $region4: #{tpu_custom_call.1} parent=1 // pred_region
      _
    $region5: #{tpu_custom_call.1} parent=1 // pred_fallthru
      _
    // Predicated region
    $region6: #{tpu_custom_call.1} parent=1 // pred_check
      _
    $region7: #{tpu_custom_call.1} parent=1 // pred_check_branch
      %18 = sbr.rel (0) target = $region9
    $region8: #{tpu_custom_call.1} parent=1 // pred_region
      _
    $region9: #{tpu_custom_call.1} parent=1 // pred_fallthru
      _
    // Predicated region
    $region10: #{tpu_custom_call.1} parent=1 // pred_check
      _
    $region11: #{tpu_custom_call.1} parent=1 // pred_check_branch
      %20 = sbr.rel (0) target = $region13
    $region12: #{tpu_custom_call.1} parent=1 // pred_region
      _
    $region13: #{tpu_custom_call.1} parent=1 // pred_fallthru
      _
    // Predicated region
    $region14: #{tpu_custom_call.1} parent=1 // pred_check
      _
    $region15: #{tpu_custom_call.1} parent=1 // pred_check_branch
      %22 = sbr.rel (0) target = $region17
    $region16: #{tpu_custom_call.1} parent=1 // pred_region
      _
    $region17: #{tpu_custom_call.1} parent=1 // pred_fallthru
      _
    // Predicated region
    $region18: #{tpu_custom_call.1} parent=1 // pred_check
      _
    $region19: #{tpu_custom_call.1} parent=1 // pred_check_branch
      %24 = sbr.rel (0) target = $region21
    $region20: #{tpu_custom_call.1} parent=1 // pred_region
      _
    $region21: #{tpu_custom_call.1} parent=1 // pred_fallthru
      _
    // Predicated region
    $region22: #{tpu_custom_call.1} parent=1 // pred_check
      _
    $region23: #{tpu_custom_call.1} parent=1 // pred_check_branch
      %26 = sbr.rel (0) target = $region25
    $region24: #{tpu_custom_call.1} parent=1 // pred_region
      _
    $region25: #{tpu_custom_call.1} parent=1 // pred_fallthru
      _
    // Predicated region
    $region26: #{tpu_custom_call.1} parent=1 // pred_check
      _
    $region27: #{tpu_custom_call.1} parent=1 // pred_check_branch
      %28 = sbr.rel (0) target = $region29
    $region28: #{tpu_custom_call.1} parent=1 // pred_region
      _
    $region29: #{tpu_custom_call.1} parent=1 // pred_fallthru
      _
    %v30 = vld [vmem:[%s0] sm:$0xf]
    %v31 = vld [vmem:[%s0 + $0x4] sm:$0xf]
    %v32 = vld [vmem:[%s1] sm:$0xf]
    %v33 = vld [vmem:[%s1 + $0x4] sm:$0xf]
    %v34 = vld [vmem:[%s1 + $0x8] sm:$0xf]
    %v35 = vld [vmem:[%s1 + $0xc] sm:$0xf]
    %v36 = vld [vmem:[%s1 + $0x10] sm:$0xf]
    %v37 = vld [vmem:[%s1 + $0x14] sm:$0xf]
    %v38 = vld [vmem:[%s1 + $0x18] sm:$0xf]
    %v39 = vld [vmem:[%s1 + $0x1c] sm:$0xf]
    %v40 = vld [vmem:[%s1 + $0x20] sm:$0xf]
    %v41 = vld [vmem:[%s1 + $0x24] sm:$0xf]
    %v42 = vld [vmem:[%s1 + $0x28] sm:$0xf]
    %v43 = vld [vmem:[%s1 + $0x2c] sm:$0x3]
    %v44 = vld [vmem:[%s2] sm:$0x1]
    %v46 = vlaneseq
    %v47 = vshrl.u32 %v46, 7
    %v48 = vsub.s32 0, %v47
    %v49 = vrot.slane %v44, %v48
    %v53 = vunpack.c.l.b16 %v30
    %v54 = vunpack.c.l.b16 %v31
    %v55 = vpack.c.b16 %v54, %v53
    %v68 = vunpack.c.l.b16 %v32
    %v69 = vunpack.c.l.b16 %v33
    %v70 = vunpack.c.l.b16 %v34
    %v71 = vunpack.c.l.b16 %v35
    %v72 = vunpack.c.l.b16 %v36
    %v73 = vunpack.c.l.b16 %v37
    %v74 = vunpack.c.l.b16 %v38
    %v75 = vunpack.c.l.b16 %v39
    %v76 = vunpack.c.l.b16 %v40
    %v77 = vunpack.c.l.b16 %v41
    %v78 = vunpack.c.l.b16 %v42
    %v79 = vunpack.c.l.b16 %v43
    %v80 = vpack.c.b16 %v69, %v68
    %v81 = vpack.c.b16 %v71, %v70
    %v82 = vpack.c.b16 %v73, %v72
    %v83 = vpack.c.b16 %v75, %v74
    %v84 = vpack.c.b16 %v77, %v76
    %v85 = vpack.c.b16 %v79, %v78
    %vm91 = vcmask 744448
    %v93 = vsel %vm91, %v55, 0
    %vm95 = vcmask 1044480
    %vm96 = vcmask 1045504
    %v97 = vsel %vm95, 4294967295, 65535
    %v98 = vsel %vm96, %v97, 0
    %v100 = vand.u32 %v85, %v98
    %102 = vmatprep.subr.bf16.mxu0 0
    %103 = vmatpush1.bf16.msra.mxu0 %v80
    %104 = vmatprep.subr.bf16.mxu0 0
    %105 = vmatpush1.bf16.msra.mxu0 %v81
    %106 = vmatprep.subr.bf16.mxu0 0
    %107 = vmatpush1.bf16.msra.mxu0 %v82
    %108 = vmatprep.subr.bf16.mxu0 0
    %109 = vmatpush1.bf16.msra.mxu0 %v83
    %110 = vmatprep.subr.bf16.mxu0 0
    %111 = vmatpush1.bf16.msra.mxu0 %v84
    %112 = vmatprep.subr.bf16.mxu0 0
    %113 = vmatpush1.bf16.msra.mxu0 %v100
    %114 = vmatprep.subr.bf16.mxu0 0
    %115 = vmatpush1.bf16.msra.mxu0 0
    %116 = vmatprep.subr.bf16.mxu0 0
    %117 = vmatpush1.bf16.msra.mxu0 0
    %118 = vmatprep.subr.bf16.mxu0 0
    %119 = vmatpush1.bf16.msra.mxu0 0
    %120 = vmatprep.subr.bf16.mxu0 0
    %121 = vmatpush1.bf16.msra.mxu0 0
    %122 = vmatprep.subr.bf16.mxu0 0
    %123 = vmatpush1.bf16.msra.mxu0 0
    %124 = vmatprep.subr.bf16.mxu0 0
    %125 = vmatpush1.bf16.msra.mxu0 0
    %126 = vmatprep.subr.bf16.mxu0 0
    %127 = vmatpush1.bf16.msra.mxu0 0
    %128 = vmatprep.subr.bf16.mxu0 0
    %129 = vmatpush1.bf16.msra.mxu0 0
    %130 = vmatprep.subr.bf16.mxu0 0
    %131 = vmatpush1.bf16.msra.mxu0 0
    %132 = vmatprep.subr.bf16.mxu0 0
    %133 = vmatpush1.bf16.msra.mxu0 0
    %134 = vmatprep.mubr.bf16.mxu0 0
    %135 = vmatmul.mubr.bf16.gmra.mrb[0].mxu0 %v93
    %v136 = vpop.f32.mrb[0].mxu0
    %v137 = vadd.f32 %v49, %v136
    %v138 = vpop.f32.mrb[0].mxu0
    %v139 = vpop.f32.mrb[0].mxu0
    %v140 = vadd.f32 %v49, %v139
    %v141 = vpop.f32.mrb[0].mxu0
    %142 = vdwg.mxu0
    %v143 = vmax.f32 %v137, 0.0
    %v144 = vmax.f32 %v140, 0.0
    %v145 = vpack.c.bf16 %v144, %v143
    %v146 = vld [vmem:[%s3] sm:$0xf]
    %v147 = vld [vmem:[%s3 + $0x4] sm:$0xf]
    %v148 = vld [vmem:[%s3 + $0x8] sm:$0xf]
    %v149 = vld [vmem:[%s3 + $0xc] sm:$0xf]
    %v150 = vld [vmem:[%s3 + $0x10] sm:$0xf]
    %v151 = vld [vmem:[%s3 + $0x14] sm:$0xf]
    %v152 = vld [vmem:[%s3 + $0x18] sm:$0xf]
    %v153 = vld [vmem:[%s3 + $0x1c] sm:$0xf]
    %v154 = vld [vmem:[%s4] sm:$0x1]
    %v156 = vlaneseq
    %v157 = vshrl.u32 %v156, 7
    %v158 = vsub.s32 0, %v157
    %v159 = vrot.slane %v154, %v158
    %v169 = vunpack.c.l.b16 %v146
    %v170 = vunpack.c.l.b16 %v147
    %v171 = vunpack.c.l.b16 %v148
    %v172 = vunpack.c.l.b16 %v149
    %v173 = vunpack.c.l.b16 %v150
    %v174 = vunpack.c.l.b16 %v151
    %v175 = vunpack.c.l.b16 %v152
    %v176 = vunpack.c.l.b16 %v153
    %v177 = vpack.c.b16 %v170, %v169
    %v178 = vpack.c.b16 %v172, %v171
    %v179 = vpack.c.b16 %v174, %v173
    %v180 = vpack.c.b16 %v176, %v175
    %vm185 = vcmask 523264
    %v187 = vsel %vm185, %v145, 0
    %189 = vmatprep.subr.bf16.mxu0 0
    %190 = vmatpush1.bf16.msra.mxu0 %v177
    %191 = vmatprep.subr.bf16.mxu0 0
    %192 = vmatpush1.bf16.msra.mxu0 %v178
    %193 = vmatprep.subr.bf16.mxu0 0
    %194 = vmatpush1.bf16.msra.mxu0 %v179
    %195 = vmatprep.subr.bf16.mxu0 0
    %196 = vmatpush1.bf16.msra.mxu0 %v180
    %197 = vmatprep.subr.bf16.mxu0 0
    %198 = vmatpush1.bf16.msra.mxu0 0
    %199 = vmatprep.subr.bf16.mxu0 0
    %200 = vmatpush1.bf16.msra.mxu0 0
    %201 = vmatprep.subr.bf16.mxu0 0
    %202 = vmatpush1.bf16.msra.mxu0 0
    %203 = vmatprep.subr.bf16.mxu0 0
    %204 = vmatpush1.bf16.msra.mxu0 0
    %205 = vmatprep.subr.bf16.mxu0 0
    %206 = vmatpush1.bf16.msra.mxu0 0
    %207 = vmatprep.subr.bf16.mxu0 0
    %208 = vmatpush1.bf16.msra.mxu0 0
    %209 = vmatprep.subr.bf16.mxu0 0
    %210 = vmatpush1.bf16.msra.mxu0 0
    %211 = vmatprep.subr.bf16.mxu0 0
    %212 = vmatpush1.bf16.msra.mxu0 0
    %213 = vmatprep.subr.bf16.mxu0 0
    %214 = vmatpush1.bf16.msra.mxu0 0
    %215 = vmatprep.subr.bf16.mxu0 0
    %216 = vmatpush1.bf16.msra.mxu0 0
    %217 = vmatprep.subr.bf16.mxu0 0
    %218 = vmatpush1.bf16.msra.mxu0 0
    %219 = vmatprep.subr.bf16.mxu0 0
    %220 = vmatpush1.bf16.msra.mxu0 0
    %221 = vmatprep.mubr.bf16.mxu0 0
    %222 = vmatmul.mubr.bf16.gmra.mrb[0].mxu0 %v187
    %v223 = vpop.f32.mrb[0].mxu0
    %v224 = vadd.f32 %v159, %v223
    %v225 = vpop.f32.mrb[0].mxu0
    %v226 = vpop.f32.mrb[0].mxu0
    %v227 = vadd.f32 %v159, %v226
    %v228 = vpop.f32.mrb[0].mxu0
    %229 = vdwg.mxu0
    %v230 = vmax.f32 %v224, 0.0
    %v231 = vmax.f32 %v227, 0.0
    %v232 = vld [vmem:[%s5] sm:$0x1]
    %v233 = vpack.c.bf16 %v231, %v230
    %v234 = vld [vmem:[#allocation2] sm:$0x1]
    %236 = vset.pattern.permute.xlu0 0
    %237 = vperm.xlu0 %236, %v234
    %v238 = vpop.permute.xlu0 %237
    %v240 = vlaneseq
    %v241 = vshrl.u32 %v240, 7
    %v242 = vsub.s32 0, %v241
    %v243 = vrot.slane %v238, %v242
    %vm244 = vcmask 261120
    %v246 = vsel %vm244, %v232, 0
    %v249 = vsel %vm244, %v233, 0
    %251 = vmatprep.subr.bf16.mxu0 0
    %252 = vmatpush1.bf16.xpose.msra.mxu0 %v249
    %253 = vmatprep.subr.bf16.mxu0 0
    %254 = vmatpush1.bf16.xpose.msra.mxu0 0
    %255 = vmatprep.subr.bf16.mxu0 0
    %256 = vmatpush1.bf16.xpose.msra.mxu0 0
    %257 = vmatprep.subr.bf16.mxu0 0
    %258 = vmatpush1.bf16.xpose.msra.mxu0 0
    %259 = vmatprep.subr.bf16.mxu0 0
    %260 = vmatpush1.bf16.xpose.msra.mxu0 0
    %261 = vmatprep.subr.bf16.mxu0 0
    %262 = vmatpush1.bf16.xpose.msra.mxu0 0
    %263 = vmatprep.subr.bf16.mxu0 0
    %264 = vmatpush1.bf16.xpose.msra.mxu0 0
    %265 = vmatprep.subr.bf16.mxu0 0
    %266 = vmatpush1.bf16.xpose.msra.mxu0 0
    %267 = vmatprep.subr.bf16.mxu0 0
    %268 = vmatpush1.bf16.xpose.msra.mxu0 0
    %269 = vmatprep.subr.bf16.mxu0 0
    %270 = vmatpush1.bf16.xpose.msra.mxu0 0
    %271 = vmatprep.subr.bf16.mxu0 0
    %272 = vmatpush1.bf16.xpose.msra.mxu0 0
    %273 = vmatprep.subr.bf16.mxu0 0
    %274 = vmatpush1.bf16.xpose.msra.mxu0 0
    %275 = vmatprep.subr.bf16.mxu0 0
    %276 = vmatpush1.bf16.xpose.msra.mxu0 0
    %277 = vmatprep.subr.bf16.mxu0 0
    %278 = vmatpush1.bf16.xpose.msra.mxu0 0
    %279 = vmatprep.subr.bf16.mxu0 0
    %280 = vmatpush1.bf16.xpose.msra.mxu0 0
    %281 = vmatprep.subr.bf16.mxu0 0
    %282 = vmatpush1.bf16.xpose.msra.mxu0 0
    %283 = vmatprep.mubr.bf16.mxu0 0
    %284 = vmatmul.mubr.bf16.gmra.mrb[0].mxu0 %v246
    %v285 = vpop.f32.mrb[0].mxu0
    %v286 = vadd.f32 %v243, %v285
    %v287 = vpop.f32.mrb[0].mxu0
    %v288 = vpop.f32.mrb[0].mxu0
    %v289 = vpop.f32.mrb[0].mxu0
    %290 = vdwg.mxu0
    %vm291 = vcmask 122880
    %292 = vst.msk [vmem:[#allocation3] sm:$0x1] %vm291, %v286
    // Predicated region
    $region30: #{tpu_custom_call.1} parent=1 // pred_check
      _
    $region31: #{tpu_custom_call.1} parent=1 // pred_check_branch
      %294 = sbr.rel (0) target = $region33
    $region32: #{tpu_custom_call.1} parent=1 // pred_region
      %s296 = ssub.s32 16, 16
      %297 = vsyncadd [#allocation4], %s296
      %s299 = sshll.u32 [#allocation3], 4
      %s300 = int_to_ptr.vmem [resolvable:$true] %s299
      %302 = dma.vmem_to_hbm [thread:$0]  %s300, 16, %s7, [#allocation4]
    $region33: #{tpu_custom_call.1} parent=1 // pred_fallthru
      _
    // Predicated region
    $region34: #{tpu_custom_call.1} parent=1 // pred_check
      _
    $region35: #{tpu_custom_call.1} parent=1 // pred_check_branch
      %304 = sbr.rel (0) target = $region37
    $region36: #{tpu_custom_call.1} parent=1 // pred_region
      %305 = dma.done [#allocation4], 16
    $region37: #{tpu_custom_call.1} parent=1 // pred_fallthru
      _
    %306 = vsyncpa [#allocation4], 1

</llo_original>
